<compile_context>
chip_gen: v7x
topology: tpu7x:2x2x1
jax: 0.10.0
libtpu: 0.0.40
codegen_flags: <defaults>
</compile_context>

<pallas_src>
import functools

import jax
import jax.numpy as jnp
from jax.experimental import pallas as pl
from jax.experimental.pallas import tpu as pltpu


def _build_pe_table(pad_size: int, embed: int) -> jnp.ndarray:
    """pe[pos, i] = sin/cos(pos / 10000 ** (i//2 * 2 / embed)) — matches __init__."""
    pos = jnp.arange(pad_size, dtype=jnp.float32)[:, None]          # [P, 1]
    i = jnp.arange(embed, dtype=jnp.int32)[None, :]                  # [1, E]
    exponent = (i // 2 * 2).astype(jnp.float32) / float(embed)       # [1, E]
    angle = pos / jnp.power(jnp.float32(10000.0), exponent)          # [P, E]
    pe = jnp.where(i % 2 == 0, jnp.sin(angle), jnp.cos(angle))       # even: sin, odd: cos
    return pe.astype(jnp.float32)


def _tile_last(n: int) -> int:
    """Lane (last-dim) tile: a multiple of 128 dividing n, capped ~4096, else full n."""
    if n % 128 != 0 or n <= 4096:
        return n
    for cand in range(4096, 127, -128):
        if n % cand == 0:
            return cand
    return n


def _tile_rows(b: int, tn: int, itemsize: int, target_bytes: int = 2 << 20) -> int:
    """Row tile: multiple of 8 dividing b (or full b), targeting ~2 MiB blocks."""
    rows = max(1, target_bytes // max(1, tn * itemsize))
    if rows >= b:
        return b
    rows = (rows // 8) * 8
    while rows >= 8:
        if b % rows == 0:
            return rows
        rows -= 8
    return b


def _pe_kernel(seed_ref, x_ref, pe_ref, o_ref, *, p: float, train: bool):
    # x_ref / o_ref block: [bb, tn];  pe_ref block: [1, tn] (broadcast over rows).
    out = x_ref[...] + pe_ref[...]
    if train and p > 0.0:
        # Inverted dropout, mask from the TPU hardware PRNG.  Seed with the
        # flat grid index so every tile gets an independent stream.
        pid = pl.program_id(0) * pl.num_programs(1) + pl.program_id(1)
        pltpu.prng_seed(seed_ref[0], pid)
        bits = pltpu.prng_random_bits(out.shape)
        if bits.dtype != jnp.uint32:
            bits = pltpu.bitcast(bits, jnp.uint32)
        threshold = jnp.uint32(min(int(p * (2 ** 32)), 2 ** 32 - 1))
        keep = (bits >= threshold).astype(out.dtype)
        out = out * (keep * (1.0 / (1.0 - p)))
    o_ref[...] = out


def positional_encoding(x: jnp.ndarray,
                        pe: jnp.ndarray,
                        *,
                        dropout_p: float = 0.1,
                        train: bool = False,
                        seed: int = 0) -> jnp.ndarray:
    """x: [B, P, E], pe: [P, E] -> dropout(x + pe), shape [B, P, E]."""
    B, P, E = x.shape
    assert pe.shape == (P, E)
    N = P * E

    # Lane-dense 2D view: [B, P*E]; pe broadcast as a [1, P*E] row.
    x2 = x.reshape(B, N)
    pe2 = pe.reshape(1, N).astype(x.dtype)

    itemsize = jnp.dtype(x.dtype).itemsize
    tn = _tile_last(N)                       # multiple of 128 (or full N)
    bb = _tile_rows(B, tn, itemsize)         # multiple of 8 dividing B (or full B)
    grid = (pl.cdiv(B, bb), N // tn)

    seed_arr = jnp.array([seed], dtype=jnp.int32)
    kernel = functools.partial(_pe_kernel, p=float(dropout_p), train=bool(train))

    grid_spec = pltpu.PrefetchScalarGridSpec(
        num_scalar_prefetch=1,
        grid=grid,
        in_specs=[
            pl.BlockSpec((bb, tn), lambda i, j, seed: (i, j)),
            # pe: same row block for every i — stays resident, no re-DMA per row-tile.
            pl.BlockSpec((1, tn), lambda i, j, seed: (0, j)),
        ],
        out_specs=pl.BlockSpec((bb, tn), lambda i, j, seed: (i, j)),
    )

    out2 = pl.pallas_call(
        kernel,
        out_shape=jax.ShapeDtypeStruct((B, N), x.dtype),
        grid_spec=grid_spec,
        compiler_params=pltpu.CompilerParams(
            dimension_semantics=("parallel", "parallel")),
    )(seed_arr, x2, pe2)
    return out2.reshape(B, P, E)


if __name__ == "__main__":
    batch, pad_size, embed = 2, 8, 32
    dropout_p = 0.1

    key = jax.random.PRNGKey(0)
    x = jax.random.normal(key, (batch, pad_size, embed), dtype=jnp.float32)
    pe = _build_pe_table(pad_size, embed)

    # Eval-mode forward (dropout is identity) — deterministic, matches the
    # PyTorch module with .eval().  The training-mode dropout path is
    # implemented above via the TPU hardware PRNG but is not exercised here
    # (it has no CPU/interpret lowering and cannot bit-match torch's RNG).
    out = positional_encoding(x, pe, dropout_p=dropout_p, train=False)
    out = jax.block_until_ready(out)

    ref = x + pe[None]
    assert jnp.allclose(out, ref, atol=1e-6, rtol=1e-6), "mismatch vs reference"

    print("KERNEL_OK")
</pallas_src>

<mosaic_0001>
module attributes {stable_mosaic.version = 11 : i64} {
  func.func @_pe_kernel(%arg0: i32, %arg1: i32, %arg2: memref<1xi32, #tpu.memory_space<smem>>, %arg3: memref<2x256xf32, #tpu.memory_space<vmem>>, %arg4: memref<1x256xf32, #tpu.memory_space<vmem>>, %arg5: memref<2x256xf32, #tpu.memory_space<vmem>>) attributes {dimension_semantics = [#tpu.dimension_semantics<parallel>, #tpu.dimension_semantics<parallel>], iteration_bounds = array<i64: 1, 1>, scalar_prefetch = 1 : i64, scratch_operands = 0 : i64, tpu.core_type = #tpu.core_type<tc>, window_params = [{transform_indices = @transform_0, window_bounds = array<i64: 2, 256>}, {transform_indices = @transform_1, window_bounds = array<i64: 1, 256>}, {transform_indices = @transform_2, window_bounds = array<i64: 2, 256>}]} {
    %c0 = arith.constant 0 : index
    %c0_0 = arith.constant 0 : index
    %0 = vector.load %arg3[%c0, %c0_0] : memref<2x256xf32, #tpu.memory_space<vmem>>, vector<2x256xf32>
    %c0_1 = arith.constant 0 : index
    %c0_2 = arith.constant 0 : index
    %1 = vector.load %arg4[%c0_1, %c0_2] : memref<1x256xf32, #tpu.memory_space<vmem>>, vector<1x256xf32>
    %2 = vector.broadcast %1 : vector<1x256xf32> to vector<2x256xf32>
    %3 = arith.addf %0, %2 : vector<2x256xf32>
    %c0_3 = arith.constant 0 : index
    %c0_4 = arith.constant 0 : index
    %4 = vector.load %arg5[%c0_3, %c0_4] : memref<2x256xf32, #tpu.memory_space<vmem>>, vector<2x256xf32>
    tpu.vector_store %arg5[%c0_3, %c0_4], %3 {strides = array<i32>} : memref<2x256xf32, #tpu.memory_space<vmem>>, vector<2x256xf32>,
    return
  }
  func.func @transform_0(%arg0: i32, %arg1: i32, %arg2: memref<1xi32, #tpu.memory_space<smem>>) -> (i32, i32) {
    %c0_i32 = arith.constant 0 : i32
    return %arg0, %arg1 : i32, i32
  }
  func.func @transform_1(%arg0: i32, %arg1: i32, %arg2: memref<1xi32, #tpu.memory_space<smem>>) -> (i32, i32) {
    %c0_i32 = arith.constant 0 : i32
    %c0_i32_0 = arith.constant 0 : i32
    return %c0_i32, %arg1 : i32, i32
  }
  func.func @transform_2(%arg0: i32, %arg1: i32, %arg2: memref<1xi32, #tpu.memory_space<smem>>) -> (i32, i32) {
    %c0_i32 = arith.constant 0 : i32
    return %arg0, %arg1 : i32, i32
  }
}

</mosaic_0001>

<llo_original>
// kernel: tpu_custom_call.1
$region0: #{tpu_custom_call.1}
  #allocation0 [shape = 'u32[]', space=smem, size = 0x4, offset = 0x4, fixed_abs, tag = 'smem constant byte address 0x4 - core index']
  #allocation1 [shape = 'u32[144,128]{1,0:T(1,128)}', space=vmem, size = 0x12000, scoped, tag = 'internal scratch']
  #allocation2 [shape = 's32[1]{0}', space=sflag, size = 0x4, scoped, tag = 'scoped memory for tpu_custom_call.1']
  #allocation3 [shape = 's32[1]{0:T(128)S(6)}', space=smem, size = 0x200, scoped, tag = 'prefetched SMEM operand 0']
  %s0 = inlined_call_operand.<no memory space> [shape: s32[1], index: 0, kind: input, shape index: {}]
  %s1 = inlined_call_operand.hbm [shape: f32[2,256], index: 1, kind: input, shape index: {}]
  %s2 = inlined_call_operand.vmem [shape: f32[1,256], index: 2, kind: input, shape index: {}]
  %s3 = inlined_call_operand.hbm [shape: f32[2,256], index: 3, kind: output, shape index: {}]
  %s4 = sld [smem:[#allocation0]]
  $region22: #{tpu_custom_call.1} parent=0
    _
  %s6 = ssub.s32 1, %s4
  %s7 = scalar_select 0, %s6, %s4
  %8 = sst [smem:[#allocation3]] %s0
  $region1: #{tpu_custom_call.1} parent=0
    #allocation4 [shape = 'u8[2048]{0}', space=vmem, size = 0x800, scoped, tag = 'input window, operand 1, single buffered']
    #allocation5 [shape = 's32[1]{0}', space=sflag, size = 0x4, scoped, tag = 'scoped memory for tpu_custom_call.1']
    #allocation6 [shape = 's32[1]{0}', space=sflag, size = 0x4, scoped, tag = 'scoped memory for tpu_custom_call.1']
    #allocation7 [shape = 'u8[2048]{0}', space=vmem, size = 0x800, scoped, tag = 'output window, operand 0, single buffered']
    %9 = vsyncpa [#allocation5], 0
    %10 = vsyncpa [#allocation6], 0
    // Predicated region
    $region2: #{tpu_custom_call.1} parent=1 // pred_check
      _
    $region3: #{tpu_custom_call.1} parent=1 // pred_check_branch
      %12 = sbr.rel (0) target = $region5
    $region4: #{tpu_custom_call.1} parent=1 // pred_region
      %s14 = ssub.s32 64, 64
      %15 = vsyncadd [#allocation5], %s14
      %s17 = sshll.u32 [#allocation4], 4
      %s18 = int_to_ptr.vmem [resolvable:$true] %s17
      %20 = dma.hbm_to_vmem [thread:$0]  %s1, 64, %s18, [#allocation5]
    $region5: #{tpu_custom_call.1} parent=1 // pred_fallthru
      _
    // Predicated region
    $region6: #{tpu_custom_call.1} parent=1 // pred_check
      _
    $region7: #{tpu_custom_call.1} parent=1 // pred_check_branch
      %22 = sbr.rel (0) target = $region9
    $region8: #{tpu_custom_call.1} parent=1 // pred_region
      _
    $region9: #{tpu_custom_call.1} parent=1 // pred_fallthru
      _
    // Predicated region
    $region10: #{tpu_custom_call.1} parent=1 // pred_check
      _
    $region11: #{tpu_custom_call.1} parent=1 // pred_check_branch
      %24 = sbr.rel (0) target = $region13
    $region12: #{tpu_custom_call.1} parent=1 // pred_region
      %25 = dma.done [#allocation5], 64
    $region13: #{tpu_custom_call.1} parent=1 // pred_fallthru
      _
    %v26 = vld [vmem:[#allocation4] sm:$0xf]
    %v27 = vld [vmem:[%s2] sm:$0x3]
    %v29 = vlaneseq
    %v30 = vshrl.u32 %v29, 7
    %v31 = vsub.s32 0, %v30
    %v32 = vrot.slane %v27, %v31
    %v33 = vlaneseq
    %v34 = vshrl.u32 %v33, 7
    %v35 = vsub.s32 1, %v34
    %v36 = vrot.slane %v27, %v35
    %v37 = vcombine.low %v32, %v36
    %v39 = vunpack.c.l.s4 1983009808
    %v40 = vunpack.c.0.s8 %v39
    %v41 = vlaneseq
    %v42 = vshrl.u32 %v41, 7
    %v43 = vsub.s32 %v40, %v42
    %v44 = vrot.slane %v37, %v43
    %v46 = vadd.f32 %v26, %v44
    %47 = vst [vmem:[#allocation7] sm:$0xf] %v46
    // Predicated region
    $region14: #{tpu_custom_call.1} parent=1 // pred_check
      _
    $region15: #{tpu_custom_call.1} parent=1 // pred_check_branch
      %49 = sbr.rel (0) target = $region17
    $region16: #{tpu_custom_call.1} parent=1 // pred_region
      %s51 = ssub.s32 64, 64
      %52 = vsyncadd [#allocation6], %s51
      %s54 = sshll.u32 [#allocation7], 4
      %s55 = int_to_ptr.vmem [resolvable:$true] %s54
      %57 = dma.vmem_to_hbm [thread:$0]  %s55, 64, %s3, [#allocation6]
    $region17: #{tpu_custom_call.1} parent=1 // pred_fallthru
      _
    // Predicated region
    $region18: #{tpu_custom_call.1} parent=1 // pred_check
      _
    $region19: #{tpu_custom_call.1} parent=1 // pred_check_branch
      %59 = sbr.rel (0) target = $region21
    $region20: #{tpu_custom_call.1} parent=1 // pred_region
      %60 = dma.done [#allocation6], 64
    $region21: #{tpu_custom_call.1} parent=1 // pred_fallthru
      _
    %61 = vsyncpa [#allocation5], 1
    %62 = vsyncpa [#allocation6], 1

</llo_original>
